<compile_context>
chip_gen: v7x
topology: tpu7x:2x2x1
jax: 0.10.0
libtpu: 0.0.40
codegen_flags: <defaults>
</compile_context>

<pallas_src>
import functools

import jax
import jax.numpy as jnp
from jax.experimental import pallas as pl
from jax.experimental.pallas import tpu as pltpu


def rnn_tanh_cell_kernel(x_ref, h_ref, w_ref, b_ref, out_ref, *, input_size):
    # Static slices of a ref are zero-cost views (input_size is a Python int;
    # rows 0:I and I:I+H are sublane-aligned for I % 8 == 0).
    w_ih_t = w_ref[:input_size, :]          # (I, H)
    w_hh_t = w_ref[input_size:, :]          # (H, H)
    acc = jnp.dot(x_ref[...], w_ih_t, preferred_element_type=jnp.float32)
    acc = acc + jnp.dot(h_ref[...], w_hh_t, preferred_element_type=jnp.float32)
    # Pre-summed bias (VPU add) + tanh (EUP) -> store.
    out_ref[...] = jnp.tanh(acc + b_ref[...]).astype(out_ref.dtype)


def prepare_rnn_tanh_cell_params(w_ih, w_hh, b_ih, b_hh):
    """One-time parameter prep.

    Args (PyTorch nn.Linear layout):
        w_ih: (H, I)  w_hh: (H, H)  b_ih: (H,)  b_hh: (H,)
    Returns:
        w_cat: (I + H, H)  — fused [W_ih^T ; W_hh^T]  (single DMA'd operand)
        b_cat: (1, H)      — b_ih + b_hh
    """
    H, I = w_ih.shape
    assert w_hh.shape == (H, H)
    w_cat = jnp.concatenate([w_ih.T, w_hh.T], axis=0)   # (I+H, H)
    b_cat = (b_ih + b_hh).reshape(1, H)                 # (1, H)
    return w_cat, b_cat


def rnn_tanh_cell(x, h, w_cat, b_cat):
    """x: (B, I), h: (B, H), w_cat: (I+H, H), b_cat: (1, H) -> hy: (B, H)."""
    B, I = x.shape
    Bh, H = h.shape
    assert Bh == B
    K, Hw = w_cat.shape
    assert K == I + H and Hw == H
    assert b_cat.shape == (1, H)

    vmem = pltpu.MemorySpace.VMEM
    cost = pl.CostEstimate(
        flops=2 * B * K * H,
        transcendentals=B * H,
        bytes_accessed=4 * (B * I + B * H + K * H + H + B * H),
    )

    kernel = functools.partial(rnn_tanh_cell_kernel, input_size=I)
    return pl.pallas_call(
        kernel,
        out_shape=jax.ShapeDtypeStruct((B, H), x.dtype),
        in_specs=[
            pl.BlockSpec(memory_space=vmem),   # x
            pl.BlockSpec(memory_space=vmem),   # h
            pl.BlockSpec(memory_space=vmem),   # fused weight
            pl.BlockSpec(memory_space=vmem),   # fused bias
        ],
        out_specs=pl.BlockSpec(memory_space=vmem),
        cost_estimate=cost,
    )(x, h, w_cat, b_cat)


def rnn_tanh_cell_ref(x, h, w_ih, w_hh, b_ih, b_hh):
    return jnp.tanh(x @ w_ih.T + b_ih + h @ w_hh.T + b_hh)


if __name__ == "__main__":
    key = jax.random.PRNGKey(0)
    B, INPUT_SIZE, HIDDEN_SIZE = 8, 16, 32

    k_x, k_h, k_wih, k_whh, k_bih, k_bhh = jax.random.split(key, 6)

    x = jax.random.normal(k_x, (B, INPUT_SIZE), dtype=jnp.float32)
    h = jax.random.normal(k_h, (B, HIDDEN_SIZE), dtype=jnp.float32)

    # Deterministic "nn.Linear"-style init: U(-1/sqrt(fan_in), 1/sqrt(fan_in)),
    # stored in PyTorch layout (out_features, in_features).
    bound_ih = 1.0 / (INPUT_SIZE ** 0.5)
    bound_hh = 1.0 / (HIDDEN_SIZE ** 0.5)
    w_ih = jax.random.uniform(k_wih, (HIDDEN_SIZE, INPUT_SIZE),
                              minval=-bound_ih, maxval=bound_ih, dtype=jnp.float32)
    w_hh = jax.random.uniform(k_whh, (HIDDEN_SIZE, HIDDEN_SIZE),
                              minval=-bound_hh, maxval=bound_hh, dtype=jnp.float32)
    b_ih = jax.random.uniform(k_bih, (HIDDEN_SIZE,),
                              minval=-bound_ih, maxval=bound_ih, dtype=jnp.float32)
    b_hh = jax.random.uniform(k_bhh, (HIDDEN_SIZE,),
                              minval=-bound_hh, maxval=bound_hh, dtype=jnp.float32)

    # One-time parameter preparation (fuse weight, pre-sum bias).
    w_cat, b_cat = prepare_rnn_tanh_cell_params(w_ih, w_hh, b_ih, b_hh)

    hy = rnn_tanh_cell(x, h, w_cat, b_cat)
    hy = jax.block_until_ready(hy)

    hy_ref = rnn_tanh_cell_ref(x, h, w_ih, w_hh, b_ih, b_hh)
    assert hy.shape == (B, HIDDEN_SIZE)
    assert jnp.allclose(hy, hy_ref, atol=1e-5, rtol=1e-5)

    print("KERNEL_OK")
</pallas_src>

<mosaic_0001>
module attributes {stable_mosaic.version = 11 : i64} {
  func.func @rnn_tanh_cell_kernel(%arg0: memref<8x16xf32, #tpu.memory_space<vmem>>, %arg1: memref<8x32xf32, #tpu.memory_space<vmem>>, %arg2: memref<48x32xf32, #tpu.memory_space<vmem>>, %arg3: memref<1x32xf32, #tpu.memory_space<vmem>>, %arg4: memref<8x32xf32, #tpu.memory_space<vmem>>) attributes {dimension_semantics = [], scalar_prefetch = 0 : i64, scratch_operands = 0 : i64, tpu.core_type = #tpu.core_type<tc>} {
    %c0 = arith.constant 0 : index
    %c0_0 = arith.constant 0 : index
    %0 = vector.load %arg2[%c0, %c0_0] : memref<48x32xf32, #tpu.memory_space<vmem>>, vector<16x32xf32>
    %c16 = arith.constant 16 : index
    %c0_1 = arith.constant 0 : index
    %1 = vector.load %arg2[%c16, %c0_1] : memref<48x32xf32, #tpu.memory_space<vmem>>, vector<32x32xf32>
    %c0_2 = arith.constant 0 : index
    %c0_3 = arith.constant 0 : index
    %2 = vector.load %arg0[%c0_2, %c0_3] : memref<8x16xf32, #tpu.memory_space<vmem>>, vector<8x16xf32>
    %cst = arith.constant dense<0.000000e+00> : vector<8x32xf32>
    %3 = tpu.matmul %2, %0, %cst {dimension_numbers = #tpu.dot_dimension_numbers<[1], [0], [0], [1], [0, 0, 1, 1], [], []>} : vector<8x16xf32>, vector<16x32xf32>, vector<8x32xf32> -> vector<8x32xf32>
    %c0_4 = arith.constant 0 : index
    %c0_5 = arith.constant 0 : index
    %4 = vector.load %arg1[%c0_4, %c0_5] : memref<8x32xf32, #tpu.memory_space<vmem>>, vector<8x32xf32>
    %cst_6 = arith.constant dense<0.000000e+00> : vector<8x32xf32>
    %5 = tpu.matmul %4, %1, %cst_6 {dimension_numbers = #tpu.dot_dimension_numbers<[1], [0], [0], [1], [0, 0, 1, 1], [], []>} : vector<8x32xf32>, vector<32x32xf32>, vector<8x32xf32> -> vector<8x32xf32>
    %6 = arith.addf %3, %5 : vector<8x32xf32>
    %c0_7 = arith.constant 0 : index
    %c0_8 = arith.constant 0 : index
    %7 = vector.load %arg3[%c0_7, %c0_8] : memref<1x32xf32, #tpu.memory_space<vmem>>, vector<1x32xf32>
    %8 = vector.broadcast %7 : vector<1x32xf32> to vector<8x32xf32>
    %9 = arith.addf %6, %8 : vector<8x32xf32>
    %10 = math.tanh %9 : vector<8x32xf32>
    %c0_9 = arith.constant 0 : index
    %c0_10 = arith.constant 0 : index
    %11 = vector.load %arg4[%c0_9, %c0_10] : memref<8x32xf32, #tpu.memory_space<vmem>>, vector<8x32xf32>
    tpu.vector_store %arg4[%c0_9, %c0_10], %10 {strides = array<i32>} : memref<8x32xf32, #tpu.memory_space<vmem>>, vector<8x32xf32>,
    return
  }
}

</mosaic_0001>

<llo_original>
// kernel: tpu_custom_call.1
$region0: #{tpu_custom_call.1}
  #allocation0 [shape = 'u32[]', space=smem, size = 0x4, offset = 0x4, fixed_abs, tag = 'smem constant byte address 0x4 - core index']
  #allocation1 [shape = 'u32[144,128]{1,0:T(1,128)}', space=vmem, size = 0x12000, scoped, tag = 'internal scratch']
  %s0 = inlined_call_operand.vmem [shape: f32[8,16], index: 0, kind: input, shape index: {}]
  %s1 = inlined_call_operand.vmem [shape: f32[8,32], index: 1, kind: input, shape index: {}]
  %s2 = inlined_call_operand.vmem [shape: f32[48,32], index: 2, kind: input, shape index: {}]
  %s3 = inlined_call_operand.vmem [shape: f32[1,32], index: 3, kind: input, shape index: {}]
  %s4 = inlined_call_operand.hbm [shape: f32[8,32], index: 4, kind: output, shape index: {}]
  %s5 = sld [smem:[#allocation0]]
  $region26: #{tpu_custom_call.1} parent=0
    _
  %s7 = ssub.s32 1, %s5
  %s8 = scalar_select 0, %s7, %s5
  $region1: #{tpu_custom_call.1} parent=0
    #allocation2 [shape = 'u8[4096]{0}', space=vmem, size = 0x1000, scoped, tag = 'output window, operand 0, single buffered']
    #allocation3 [shape = 's32[1]{0}', space=sflag, size = 0x4, scoped, tag = 'scoped memory for tpu_custom_call.1']
    %9 = vsyncpa [#allocation3], 0
    // Predicated region
    $region2: #{tpu_custom_call.1} parent=1 // pred_check
      _
    $region3: #{tpu_custom_call.1} parent=1 // pred_check_branch
      %11 = sbr.rel (0) target = $region5
    $region4: #{tpu_custom_call.1} parent=1 // pred_region
      _
    $region5: #{tpu_custom_call.1} parent=1 // pred_fallthru
      _
    // Predicated region
    $region6: #{tpu_custom_call.1} parent=1 // pred_check
      _
    $region7: #{tpu_custom_call.1} parent=1 // pred_check_branch
      %13 = sbr.rel (0) target = $region9
    $region8: #{tpu_custom_call.1} parent=1 // pred_region
      _
    $region9: #{tpu_custom_call.1} parent=1 // pred_fallthru
      _
    // Predicated region
    $region10: #{tpu_custom_call.1} parent=1 // pred_check
      _
    $region11: #{tpu_custom_call.1} parent=1 // pred_check_branch
      %15 = sbr.rel (0) target = $region13
    $region12: #{tpu_custom_call.1} parent=1 // pred_region
      _
    $region13: #{tpu_custom_call.1} parent=1 // pred_fallthru
      _
    // Predicated region
    $region14: #{tpu_custom_call.1} parent=1 // pred_check
      _
    $region15: #{tpu_custom_call.1} parent=1 // pred_check_branch
      %17 = sbr.rel (0) target = $region17
    $region16: #{tpu_custom_call.1} parent=1 // pred_region
      _
    $region17: #{tpu_custom_call.1} parent=1 // pred_fallthru
      _
    %v18 = vld [vmem:[%s2] sm:$0xff]
    %v19 = vld [vmem:[%s2 + $0x8] sm:$0xff]
    %v20 = vld [vmem:[%s2 + $0x10] sm:$0xff]
    %v21 = vld [vmem:[%s2 + $0x18] sm:$0xff]
    %v22 = vld [vmem:[%s2 + $0x20] sm:$0xff]
    %v23 = vld [vmem:[%s2 + $0x28] sm:$0xff]
    %v24 = vld [vmem:[%s0] sm:$0xff]
    %v25 = vld [vmem:[%s1] sm:$0xff]
    %vm26 = vcmask 261120
    %v28 = vsel %vm26, %v25, 0
    %30 = vmatprep.subr.mxu0 0.0
    %31 = vmatpush1.msra.mxu0 %v20
    %32 = vmatprep.subr.mxu0 0.0
    %33 = vmatpush1.msra.mxu0 %v21
    %34 = vmatprep.subr.mxu0 0.0
    %35 = vmatpush1.msra.mxu0 %v22
    %36 = vmatprep.subr.mxu0 0.0
    %37 = vmatpush1.msra.mxu0 %v23
    %38 = vmatprep.subr.mxu0 0.0
    %39 = vmatpush1.msra.mxu0 0.0
    %40 = vmatprep.subr.mxu0 0.0
    %41 = vmatpush1.msra.mxu0 0.0
    %42 = vmatprep.subr.mxu0 0.0
    %43 = vmatpush1.msra.mxu0 0.0
    %44 = vmatprep.subr.mxu0 0.0
    %45 = vmatpush1.msra.mxu0 0.0
    %46 = vmatprep.subr.mxu0 0.0
    %47 = vmatpush1.msra.mxu0 0.0
    %48 = vmatprep.subr.mxu0 0.0
    %49 = vmatpush1.msra.mxu0 0.0
    %50 = vmatprep.subr.mxu0 0.0
    %51 = vmatpush1.msra.mxu0 0.0
    %52 = vmatprep.subr.mxu0 0.0
    %53 = vmatpush1.msra.mxu0 0.0
    %54 = vmatprep.subr.mxu0 0.0
    %55 = vmatpush1.msra.mxu0 0.0
    %56 = vmatprep.subr.mxu0 0.0
    %57 = vmatpush1.msra.mxu0 0.0
    %58 = vmatprep.subr.mxu0 0.0
    %59 = vmatpush1.msra.mxu0 0.0
    %60 = vmatprep.subr.mxu0 0.0
    %61 = vmatpush1.msra.mxu0 0.0
    %62 = vmatprep.subr.mxu0 0.0
    %63 = vmatpush1.msra.mxu0 0.0
    %64 = vmatprep.subr.mxu0 0.0
    %65 = vmatpush1.msra.mxu0 0.0
    %66 = vmatprep.subr.mxu0 0.0
    %67 = vmatpush1.msra.mxu0 0.0
    %68 = vmatprep.subr.mxu0 0.0
    %69 = vmatpush1.msra.mxu0 0.0
    %70 = vmatprep.subr.mxu0 0.0
    %71 = vmatpush1.msra.mxu0 0.0
    %72 = vmatprep.subr.mxu0 0.0
    %73 = vmatpush1.msra.mxu0 0.0
    %74 = vmatprep.subr.mxu0 0.0
    %75 = vmatpush1.msra.mxu0 0.0
    %76 = vmatprep.subr.mxu0 0.0
    %77 = vmatpush1.msra.mxu0 0.0
    %78 = vmatprep.subr.mxu0 0.0
    %79 = vmatpush1.msra.mxu0 0.0
    %80 = vmatprep.subr.mxu0 0.0
    %81 = vmatpush1.msra.mxu0 0.0
    %82 = vmatprep.subr.mxu0 0.0
    %83 = vmatpush1.msra.mxu0 0.0
    %84 = vmatprep.subr.mxu0 0.0
    %85 = vmatpush1.msra.mxu0 0.0
    %86 = vmatprep.subr.mxu0 0.0
    %87 = vmatpush1.msra.mxu0 0.0
    %88 = vmatprep.subr.mxu0 0.0
    %89 = vmatpush1.msra.mxu0 0.0
    %90 = vmatprep.subr.mxu0 0.0
    %91 = vmatpush1.msra.mxu0 0.0
    %92 = vmatprep.subr.mxu0 0.0
    %93 = vmatpush1.msra.mxu0 0.0
    %94 = vmatprep.mubr.f32.mxu0 0.0
    %95 = vmatmul.mubr.f32.gmra.mrb[0].mxu0 %v28
    %v96 = vpop.f32.mrb[0].mxu0
    %v97 = vadd.f32 0.0, %v96
    %v98 = vpop.f32.mrb[0].mxu0
    %99 = vdwg.mxu0
    %vm100 = vcmask 130048
    %v102 = vsel %vm100, %v24, 0
    %104 = vmatprep.subr.mxu0 0.0
    %105 = vmatpush1.msra.mxu0 %v18
    %106 = vmatprep.subr.mxu0 0.0
    %107 = vmatpush1.msra.mxu0 %v19
    %108 = vmatprep.subr.mxu0 0.0
    %109 = vmatpush1.msra.mxu0 0.0
    %110 = vmatprep.subr.mxu0 0.0
    %111 = vmatpush1.msra.mxu0 0.0
    %112 = vmatprep.subr.mxu0 0.0
    %113 = vmatpush1.msra.mxu0 0.0
    %114 = vmatprep.subr.mxu0 0.0
    %115 = vmatpush1.msra.mxu0 0.0
    %116 = vmatprep.subr.mxu0 0.0
    %117 = vmatpush1.msra.mxu0 0.0
    %118 = vmatprep.subr.mxu0 0.0
    %119 = vmatpush1.msra.mxu0 0.0
    %120 = vmatprep.subr.mxu0 0.0
    %121 = vmatpush1.msra.mxu0 0.0
    %122 = vmatprep.subr.mxu0 0.0
    %123 = vmatpush1.msra.mxu0 0.0
    %124 = vmatprep.subr.mxu0 0.0
    %125 = vmatpush1.msra.mxu0 0.0
    %126 = vmatprep.subr.mxu0 0.0
    %127 = vmatpush1.msra.mxu0 0.0
    %128 = vmatprep.subr.mxu0 0.0
    %129 = vmatpush1.msra.mxu0 0.0
    %130 = vmatprep.subr.mxu0 0.0
    %131 = vmatpush1.msra.mxu0 0.0
    %132 = vmatprep.subr.mxu0 0.0
    %133 = vmatpush1.msra.mxu0 0.0
    %134 = vmatprep.subr.mxu0 0.0
    %135 = vmatpush1.msra.mxu0 0.0
    %136 = vmatprep.subr.mxu0 0.0
    %137 = vmatpush1.msra.mxu0 0.0
    %138 = vmatprep.subr.mxu0 0.0
    %139 = vmatpush1.msra.mxu0 0.0
    %140 = vmatprep.subr.mxu0 0.0
    %141 = vmatpush1.msra.mxu0 0.0
    %142 = vmatprep.subr.mxu0 0.0
    %143 = vmatpush1.msra.mxu0 0.0
    %144 = vmatprep.subr.mxu0 0.0
    %145 = vmatpush1.msra.mxu0 0.0
    %146 = vmatprep.subr.mxu0 0.0
    %147 = vmatpush1.msra.mxu0 0.0
    %148 = vmatprep.subr.mxu0 0.0
    %149 = vmatpush1.msra.mxu0 0.0
    %150 = vmatprep.subr.mxu0 0.0
    %151 = vmatpush1.msra.mxu0 0.0
    %152 = vmatprep.subr.mxu0 0.0
    %153 = vmatpush1.msra.mxu0 0.0
    %154 = vmatprep.subr.mxu0 0.0
    %155 = vmatpush1.msra.mxu0 0.0
    %156 = vmatprep.subr.mxu0 0.0
    %157 = vmatpush1.msra.mxu0 0.0
    %158 = vmatprep.subr.mxu0 0.0
    %159 = vmatpush1.msra.mxu0 0.0
    %160 = vmatprep.subr.mxu0 0.0
    %161 = vmatpush1.msra.mxu0 0.0
    %162 = vmatprep.subr.mxu0 0.0
    %163 = vmatpush1.msra.mxu0 0.0
    %164 = vmatprep.subr.mxu0 0.0
    %165 = vmatpush1.msra.mxu0 0.0
    %166 = vmatprep.subr.mxu0 0.0
    %167 = vmatpush1.msra.mxu0 0.0
    %168 = vmatprep.mubr.f32.mxu0 0.0
    %169 = vmatmul.mubr.f32.gmra.mrb[0].mxu0 %v102
    %v170 = vpop.f32.mrb[0].mxu0
    %v171 = vadd.f32 %v97, %v170
    %v172 = vpop.f32.mrb[0].mxu0
    %173 = vdwg.mxu0
    %v174 = vld [vmem:[%s3] sm:$0x1]
    %v176 = vlaneseq
    %v177 = vshrl.u32 %v176, 7
    %v178 = vsub.s32 0, %v177
    %v179 = vrot.slane %v174, %v178
    %v181 = vadd.f32 %v171, %v179
    %v182 = vtanh.pop %v181
    %183 = vst.msk [vmem:[#allocation2] sm:$0xff] %vm26, %v182
    // Predicated region
    $region18: #{tpu_custom_call.1} parent=1 // pred_check
      _
    $region19: #{tpu_custom_call.1} parent=1 // pred_check_branch
      %185 = sbr.rel (0) target = $region21
    $region20: #{tpu_custom_call.1} parent=1 // pred_region
      %s187 = ssub.s32 128, 128
      %188 = vsyncadd [#allocation3], %s187
      %s190 = sshll.u32 [#allocation2], 4
      %s191 = int_to_ptr.vmem [resolvable:$true] %s190
      %193 = dma.vmem_to_hbm [thread:$0]  %s191, 128, %s4, [#allocation3]
    $region21: #{tpu_custom_call.1} parent=1 // pred_fallthru
      _
    // Predicated region
    $region22: #{tpu_custom_call.1} parent=1 // pred_check
      _
    $region23: #{tpu_custom_call.1} parent=1 // pred_check_branch
      %195 = sbr.rel (0) target = $region25
    $region24: #{tpu_custom_call.1} parent=1 // pred_region
      %196 = dma.done [#allocation3], 128
    $region25: #{tpu_custom_call.1} parent=1 // pred_fallthru
      _
    %197 = vsyncpa [#allocation3], 1

</llo_original>
